<compile_context>
chip_gen: v7x
topology: tpu7x:2x2x1
jax: 0.10.0
libtpu: 0.0.40
codegen_flags: <defaults>
</compile_context>

<pallas_src>
import jax
import jax.numpy as jnp
from jax import lax
from jax.experimental import pallas as pl
from jax.experimental.pallas import tpu as pltpu


def _round_up(x, m):
    return ((x + m - 1) // m) * m


def _linear_kernel(x_ref, w_ref, b_ref, o_ref, acc_ref):
    # x_ref: (tm, tk)  w_ref: (tn, tk)  b_ref: (1, tn)  o_ref: (tm, tn)
    # acc_ref: f32 VMEM scratch (tm, tn), resident across the K (reduction) axis.
    @pl.when(pl.program_id(2) == 0)
    def _():
        acc_ref[...] = jnp.zeros_like(acc_ref)

    # x @ W^T: contract dim 1 of x with dim 1 of W, f32 MXU accumulation.
    acc_ref[...] += lax.dot_general(
        x_ref[...], w_ref[...],
        dimension_numbers=(((1,), (1,)), ((), ())),
        preferred_element_type=jnp.float32,
    )

    @pl.when(pl.program_id(2) == pl.num_programs(2) - 1)
    def _():
        # f32 epilogue (bias broadcast-add), then cast to output dtype.
        o_ref[...] = (acc_ref[...] + b_ref[...].astype(jnp.float32)).astype(o_ref.dtype)


def prepare_linear_params(weight, bias, *, k_tile=512, k_tile_threshold=2048):
    """Pad nn.Linear parameters ONCE at model-load time (not per forward call).

    weight: (out_dim, in_dim), bias: (out_dim,)
      -> w_padded: (out_pad, in_pad)  [out_pad mult of 128; in_pad mult of k_tile
         only when in_dim is large enough to be K-tiled]
      -> b_padded: (1, out_pad)
    """
    out_dim, in_dim = weight.shape
    out_pad = _round_up(out_dim, 128)                      # lane-dense output columns
    in_pad = _round_up(in_dim, k_tile) if in_dim >= k_tile_threshold else in_dim
    w_padded = jnp.pad(weight, ((0, out_pad - out_dim), (0, in_pad - in_dim)))
    b_padded = jnp.pad(bias, (0, out_pad - out_dim)).reshape(1, out_pad)
    return w_padded, b_padded


def _pick_n_tile(out_pad, n_tile):
    # Prefer multiples of 256 (v6e/v7x MXU is 2x256x256); must divide out_pad.
    for cand in (n_tile, 512, 256, 128):
        if cand <= out_pad and out_pad % cand == 0:
            return cand
    return out_pad


def linear_forward(x, w_padded, b_padded, out_dim, *,
                   batch_tile=512, k_tile=512, n_tile=512,
                   vmem_weight_budget=32 << 20):
    """x: (B, in_dim); w_padded: (out_pad, in_pad); b_padded: (1, out_pad)."""
    B, in_dim = x.shape
    out_pad, in_pad = w_padded.shape
    assert b_padded.shape == (1, out_pad)
    assert in_pad >= in_dim and out_pad >= out_dim

    x_item = jnp.dtype(x.dtype).itemsize
    w_item = jnp.dtype(w_padded.dtype).itemsize
    b_item = jnp.dtype(b_padded.dtype).itemsize
    # Sublane packing depends on dtype: 8 for f32, 16 for bf16, 32 for int8.
    sublane = max(8, (8 * 4) // x_item)

    # ---- K (contraction) tiling: only for large in_dim (params padded to match).
    if in_pad >= 2048 and in_pad % k_tile == 0 and in_pad > k_tile:
        tk = k_tile
    else:
        tk = in_pad                                         # full-extent K block
    grid_k = in_pad // tk

    # ---- N (output) tiling: keep the weight working set under the VMEM budget.
    w_full_bytes = out_pad * tk * w_item                    # per buffer
    use_single_buffer_w = False
    if 2 * w_full_bytes <= vmem_weight_budget:
        tn = out_pad                                        # whole weight resident, double-buffered
    elif grid_k == 1 and w_full_bytes <= vmem_weight_budget:
        tn = out_pad                                        # resident, but single-buffered:
        use_single_buffer_w = True                          # block index is constant across grid
    else:
        tn = _pick_n_tile(out_pad, n_tile)                  # N-tile (256/512-wide)
    grid_n = out_pad // tn

    # ---- M (batch) tiling.
    b_pad = _round_up(B, sublane)
    tm = min(batch_tile, b_pad)
    # v7x has 2 TensorCores: for large batches make sure grid_m >= 2 so the
    # "parallel" batch axis actually has work for both cores.
    if tm == b_pad and b_pad >= 256:
        tm = _round_up(pl.cdiv(b_pad, 2), sublane)
    grid_m = pl.cdiv(b_pad, tm)
    b_full = grid_m * tm

    # ---- VMEM limit from the actual tile/buffer sizes (+ headroom).
    w_bufs = 1 if use_single_buffer_w else 2
    vmem_bytes = (
        2 * tm * tk * x_item                                # x double buffer
        + w_bufs * tn * tk * w_item                         # weight buffer(s)
        + 2 * 8 * tn * b_item                               # bias (sublane-padded)
        + 2 * tm * tn * x_item                              # output double buffer
        + tm * tn * 4                                       # f32 accumulator scratch
    )
    vmem_limit = min(max(int(vmem_bytes * 1.5) + (4 << 20), 32 << 20), 64 << 20)

    # ---- Fast path: only touch x if the batch or K dim is actually ragged.
    pad_rows = b_full - B
    pad_k = in_pad - in_dim
    if pad_rows or pad_k:
        x_in = jnp.pad(x, ((0, pad_rows), (0, pad_k)))
    else:
        x_in = x                                            # no extra HBM pass over x

    # Advisory cost hint for the XLA scheduler (per-operand itemsizes).
    cost = pl.CostEstimate(
        flops=2 * b_full * in_pad * out_pad,
        transcendentals=0,
        bytes_accessed=(b_full * in_pad * x_item
                        + out_pad * in_pad * w_item
                        + out_pad * b_item
                        + b_full * out_pad * x_item),
    )

    # Weight BlockSpec: single-buffer it when its block never changes (its whole
    # footprint then fits where double-buffering would not, e.g. v7x 64 MiB VMEM).
    w_spec_kwargs = {}
    if use_single_buffer_w:
        w_spec_kwargs["pipeline_mode"] = pl.Buffered(1)
    w_spec = pl.BlockSpec((tn, tk), lambda i, j, k: (j, k), **w_spec_kwargs)

    out_padded = pl.pallas_call(
        _linear_kernel,
        out_shape=jax.ShapeDtypeStruct((b_full, out_pad), x.dtype),
        grid_spec=pltpu.PrefetchScalarGridSpec(
            num_scalar_prefetch=0,
            grid=(grid_m, grid_n, grid_k),
            in_specs=[
                pl.BlockSpec((tm, tk), lambda i, j, k: (i, k)),   # x tile
                w_spec,                                           # weight tile
                pl.BlockSpec((1, tn), lambda i, j, k: (0, j)),    # bias row tile
            ],
            out_specs=pl.BlockSpec((tm, tn), lambda i, j, k: (i, j)),
            scratch_shapes=[pltpu.VMEM((tm, tn), jnp.float32)],   # f32 accumulator
        ),
        compiler_params=pltpu.CompilerParams(
            dimension_semantics=("parallel", "parallel", "arbitrary"),
            vmem_limit_bytes=vmem_limit,
        ),
        cost_estimate=cost,
    )(x_in, w_padded, b_padded)

    # ---- Fast path on the output: skip the slice entirely for aligned shapes.
    if pad_rows == 0 and out_pad == out_dim:
        return out_padded
    if pad_rows == 0:
        return out_padded[:, :out_dim]
    if out_pad == out_dim:
        return out_padded[:B]
    return out_padded[:B, :out_dim]


def linear_regression_forward(x, weight, bias):
    """Convenience one-shot wrapper (pads params inline). For repeated calls,
    use prepare_linear_params(...) once and call linear_forward(...)."""
    w_p, b_p = prepare_linear_params(weight, bias)
    return linear_forward(x, w_p, b_p, weight.shape[0])


if __name__ == "__main__":
    # Small shapes consistent with the module: input_dim=32, output_dim=16, batch=8.
    batch, input_dim, output_dim = 8, 32, 16

    key = jax.random.PRNGKey(0)
    kx, kw, kb = jax.random.split(key, 3)

    # Deterministic parameter init mirroring nn.Linear's default:
    # U(-1/sqrt(in_dim), 1/sqrt(in_dim)) for both weight and bias.
    bound = 1.0 / (input_dim ** 0.5)
    weight = jax.random.uniform(kw, (output_dim, input_dim), jnp.float32,
                                minval=-bound, maxval=bound)
    bias = jax.random.uniform(kb, (output_dim,), jnp.float32,
                              minval=-bound, maxval=bound)
    x = jax.random.normal(kx, (batch, input_dim), jnp.float32)

    # Parameter padding hoisted out of the per-call path (done once at "load time").
    w_p, b_p = prepare_linear_params(weight, bias)
    w_p, b_p = jax.block_until_ready((w_p, b_p))

    out = linear_forward(x, w_p, b_p, output_dim)
    out = jax.block_until_ready(out)

    # Sanity check against plain-JAX reference.
    ref = x @ weight.T + bias
    assert out.shape == (batch, output_dim)
    assert jnp.allclose(out, ref, atol=1e-5, rtol=1e-5)

    print("KERNEL_OK")
</pallas_src>

<mosaic_0001>
module attributes {stable_mosaic.version = 11 : i64} {
  func.func @_linear_kernel(%arg0: i32, %arg1: i32, %arg2: i32, %arg3: memref<8x32xf32, #tpu.memory_space<vmem>>, %arg4: memref<128x32xf32, #tpu.memory_space<vmem>>, %arg5: memref<1x128xf32, #tpu.memory_space<vmem>>, %arg6: memref<8x128xf32, #tpu.memory_space<vmem>>, %arg7: memref<8x128xf32, #tpu.memory_space<vmem>>) attributes {dimension_semantics = [#tpu.dimension_semantics<parallel>, #tpu.dimension_semantics<parallel>, #tpu.dimension_semantics<arbitrary>], iteration_bounds = array<i64: 1, 1, 1>, scalar_prefetch = 0 : i64, scratch_operands = 1 : i64, tpu.core_type = #tpu.core_type<tc>, window_params = [{transform_indices = @transform_0, window_bounds = array<i64: 8, 32>}, {transform_indices = @transform_1, window_bounds = array<i64: 128, 32>}, {transform_indices = @transform_2, window_bounds = array<i64: 1, 128>}, {transform_indices = @transform_3, window_bounds = array<i64: 8, 128>}]} {
    %c0_i32 = arith.constant 0 : i32
    %0 = arith.cmpi eq, %arg2, %c0_i32 : i32
    %1 = arith.extui %0 : i1 to i32
    %c0_i32_0 = arith.constant 0 : i32
    %2 = arith.cmpi ne, %1, %c0_i32_0 : i32
    scf.if %2 {
      %cst_10 = arith.constant 0.000000e+00 : f32
      %12 = vector.broadcast %cst_10 : f32 to vector<8x128xf32>
      %c0_11 = arith.constant 0 : index
      %c0_12 = arith.constant 0 : index
      %13 = vector.load %arg7[%c0_11, %c0_12] : memref<8x128xf32, #tpu.memory_space<vmem>>, vector<8x128xf32>
      tpu.vector_store %arg7[%c0_11, %c0_12], %12 {strides = array<i32>} : memref<8x128xf32, #tpu.memory_space<vmem>>, vector<8x128xf32>,
    } else {
    }
    %c0 = arith.constant 0 : index
    %c0_1 = arith.constant 0 : index
    %3 = vector.load %arg7[%c0, %c0_1] : memref<8x128xf32, #tpu.memory_space<vmem>>, vector<8x128xf32>
    %c0_2 = arith.constant 0 : index
    %c0_3 = arith.constant 0 : index
    %4 = vector.load %arg3[%c0_2, %c0_3] : memref<8x32xf32, #tpu.memory_space<vmem>>, vector<8x32xf32>
    %c0_4 = arith.constant 0 : index
    %c0_5 = arith.constant 0 : index
    %5 = vector.load %arg4[%c0_4, %c0_5] : memref<128x32xf32, #tpu.memory_space<vmem>>, vector<128x32xf32>
    %cst = arith.constant dense<0.000000e+00> : vector<8x128xf32>
    %6 = tpu.matmul %4, %5, %cst {dimension_numbers = #tpu.dot_dimension_numbers<[1], [1], [0], [0], [0, 0, 1, 0], [], []>} : vector<8x32xf32>, vector<128x32xf32>, vector<8x128xf32> -> vector<8x128xf32>
    %7 = arith.addf %3, %6 : vector<8x128xf32>
    %c0_6 = arith.constant 0 : index
    %c0_7 = arith.constant 0 : index
    %8 = vector.load %arg7[%c0_6, %c0_7] : memref<8x128xf32, #tpu.memory_space<vmem>>, vector<8x128xf32>
    tpu.vector_store %arg7[%c0_6, %c0_7], %7 {strides = array<i32>} : memref<8x128xf32, #tpu.memory_space<vmem>>, vector<8x128xf32>,
    %c0_i32_8 = arith.constant 0 : i32
    %9 = arith.cmpi eq, %arg2, %c0_i32_8 : i32
    %10 = arith.extui %9 : i1 to i32
    %c0_i32_9 = arith.constant 0 : i32
    %11 = arith.cmpi ne, %10, %c0_i32_9 : i32
    scf.if %11 {
      %c0_10 = arith.constant 0 : index
      %c0_11 = arith.constant 0 : index
      %12 = vector.load %arg7[%c0_10, %c0_11] : memref<8x128xf32, #tpu.memory_space<vmem>>, vector<8x128xf32>
      %c0_12 = arith.constant 0 : index
      %c0_13 = arith.constant 0 : index
      %13 = vector.load %arg5[%c0_12, %c0_13] : memref<1x128xf32, #tpu.memory_space<vmem>>, vector<1x128xf32>
      %14 = vector.broadcast %13 : vector<1x128xf32> to vector<8x128xf32>
      %15 = arith.addf %12, %14 : vector<8x128xf32>
      %c0_14 = arith.constant 0 : index
      %c0_15 = arith.constant 0 : index
      %16 = vector.load %arg6[%c0_14, %c0_15] : memref<8x128xf32, #tpu.memory_space<vmem>>, vector<8x128xf32>
      tpu.vector_store %arg6[%c0_14, %c0_15], %15 {strides = array<i32>} : memref<8x128xf32, #tpu.memory_space<vmem>>, vector<8x128xf32>,
    } else {
    }
    return
  }
  func.func @transform_0(%arg0: i32, %arg1: i32, %arg2: i32) -> (i32, i32) {
    %c0_i32 = arith.constant 0 : i32
    return %arg0, %arg2 : i32, i32
  }
  func.func @transform_1(%arg0: i32, %arg1: i32, %arg2: i32) -> (i32, i32) {
    %c0_i32 = arith.constant 0 : i32
    return %arg1, %arg2 : i32, i32
  }
  func.func @transform_2(%arg0: i32, %arg1: i32, %arg2: i32) -> (i32, i32) {
    %c0_i32 = arith.constant 0 : i32
    %c0_i32_0 = arith.constant 0 : i32
    return %c0_i32, %arg1 : i32, i32
  }
  func.func @transform_3(%arg0: i32, %arg1: i32, %arg2: i32) -> (i32, i32) {
    %c0_i32 = arith.constant 0 : i32
    return %arg0, %arg1 : i32, i32
  }
}

</mosaic_0001>

<llo_original>
// kernel: tpu_custom_call.1
$region0: #{tpu_custom_call.1}
  #allocation0 [shape = 'u32[]', space=smem, size = 0x4, offset = 0x4, fixed_abs, tag = 'smem constant byte address 0x4 - core index']
  #allocation1 [shape = 'u32[144,128]{1,0:T(1,128)}', space=vmem, size = 0x12000, scoped, tag = 'internal scratch']
  #allocation2 [shape = 'f32[8,128]{1,0:T(8,128)}', space=vmem, size = 0x1000, scoped, tag = 'scratch operand']
  %s0 = inlined_call_operand.vmem [shape: f32[8,32], index: 0, kind: input, shape index: {}]
  %s1 = inlined_call_operand.vmem [shape: f32[128,32], index: 1, kind: input, shape index: {}]
  %s2 = inlined_call_operand.vmem [shape: f32[1,128], index: 2, kind: input, shape index: {}]
  %s3 = inlined_call_operand.hbm [shape: f32[8,128], index: 3, kind: output, shape index: {}]
  %s4 = sld [smem:[#allocation0]]
  $region30: #{tpu_custom_call.1} parent=0
    _
  %s6 = ssub.s32 1, %s4
  %s7 = scalar_select 0, %s6, %s4
  $region1: #{tpu_custom_call.1} parent=0
    #allocation3 [shape = 'u8[4096]{0}', space=vmem, size = 0x1000, scoped, tag = 'output window, operand 0, single buffered']
    #allocation4 [shape = 's32[1]{0}', space=sflag, size = 0x4, scoped, tag = 'scoped memory for tpu_custom_call.1']
    %8 = vsyncpa [#allocation4], 0
    // Predicated region
    $region2: #{tpu_custom_call.1} parent=1 // pred_check
      _
    $region3: #{tpu_custom_call.1} parent=1 // pred_check_branch
      %10 = sbr.rel (0) target = $region5
    $region4: #{tpu_custom_call.1} parent=1 // pred_region
      _
    $region5: #{tpu_custom_call.1} parent=1 // pred_fallthru
      _
    // Predicated region
    $region6: #{tpu_custom_call.1} parent=1 // pred_check
      _
    $region7: #{tpu_custom_call.1} parent=1 // pred_check_branch
      %12 = sbr.rel (0) target = $region9
    $region8: #{tpu_custom_call.1} parent=1 // pred_region
      _
    $region9: #{tpu_custom_call.1} parent=1 // pred_fallthru
      _
    // Predicated region
    $region10: #{tpu_custom_call.1} parent=1 // pred_check
      _
    $region11: #{tpu_custom_call.1} parent=1 // pred_check_branch
      %14 = sbr.rel (0) target = $region13
    $region12: #{tpu_custom_call.1} parent=1 // pred_region
      _
    $region13: #{tpu_custom_call.1} parent=1 // pred_fallthru
      _
    %p15 = scmp.eq.s32.totalorder 0, 0
    // Predicated region
    $region14: #{tpu_custom_call.1} parent=1 // pred_check
      %p16 = pneg %p15
    $region15: #{tpu_custom_call.1} parent=1 // pred_check_branch
      %18 = sbr.rel (%p16) target = $region17
    $region16: #{tpu_custom_call.1} parent=1 // pred_region
      %19 = vst [vmem:[#allocation2] sm:$0xff] 0.0
    $region17: #{tpu_custom_call.1} parent=1 // pred_fallthru
      _
    %v20 = vld [vmem:[#allocation2] sm:$0xff]
    %v21 = vld [vmem:[%s0] sm:$0xff]
    %v22 = vld [vmem:[%s1] sm:$0xff]
    %v23 = vld [vmem:[%s1 + $0x8] sm:$0xff]
    %v24 = vld [vmem:[%s1 + $0x10] sm:$0xff]
    %v25 = vld [vmem:[%s1 + $0x18] sm:$0xff]
    %v26 = vld [vmem:[%s1 + $0x20] sm:$0xff]
    %v27 = vld [vmem:[%s1 + $0x28] sm:$0xff]
    %v28 = vld [vmem:[%s1 + $0x30] sm:$0xff]
    %v29 = vld [vmem:[%s1 + $0x38] sm:$0xff]
    %v30 = vld [vmem:[%s1 + $0x40] sm:$0xff]
    %v31 = vld [vmem:[%s1 + $0x48] sm:$0xff]
    %v32 = vld [vmem:[%s1 + $0x50] sm:$0xff]
    %v33 = vld [vmem:[%s1 + $0x58] sm:$0xff]
    %v34 = vld [vmem:[%s1 + $0x60] sm:$0xff]
    %v35 = vld [vmem:[%s1 + $0x68] sm:$0xff]
    %v36 = vld [vmem:[%s1 + $0x70] sm:$0xff]
    %v37 = vld [vmem:[%s1 + $0x78] sm:$0xff]
    %vm38 = vcmask 261120
    %v40 = vsel %vm38, %v21, 0
    %v43 = vsel %vm38, %v22, 0
    %v46 = vsel %vm38, %v23, 0
    %v49 = vsel %vm38, %v24, 0
    %v52 = vsel %vm38, %v25, 0
    %v55 = vsel %vm38, %v26, 0
    %v58 = vsel %vm38, %v27, 0
    %v61 = vsel %vm38, %v28, 0
    %v64 = vsel %vm38, %v29, 0
    %v67 = vsel %vm38, %v30, 0
    %v70 = vsel %vm38, %v31, 0
    %v73 = vsel %vm38, %v32, 0
    %v76 = vsel %vm38, %v33, 0
    %v79 = vsel %vm38, %v34, 0
    %v82 = vsel %vm38, %v35, 0
    %v85 = vsel %vm38, %v36, 0
    %v88 = vsel %vm38, %v37, 0
    %90 = vmatprep.subr.mxu0 0.0
    %91 = vmatpush1.xpose.msra.mxu0 %v43
    %92 = vmatprep.subr.mxu0 0.0
    %93 = vmatpush1.xpose.msra.mxu0 %v46
    %94 = vmatprep.subr.mxu0 0.0
    %95 = vmatpush1.xpose.msra.mxu0 %v49
    %96 = vmatprep.subr.mxu0 0.0
    %97 = vmatpush1.xpose.msra.mxu0 %v52
    %98 = vmatprep.subr.mxu0 0.0
    %99 = vmatpush1.xpose.msra.mxu0 %v55
    %100 = vmatprep.subr.mxu0 0.0
    %101 = vmatpush1.xpose.msra.mxu0 %v58
    %102 = vmatprep.subr.mxu0 0.0
    %103 = vmatpush1.xpose.msra.mxu0 %v61
    %104 = vmatprep.subr.mxu0 0.0
    %105 = vmatpush1.xpose.msra.mxu0 %v64
    %106 = vmatprep.subr.mxu0 0.0
    %107 = vmatpush1.xpose.msra.mxu0 %v67
    %108 = vmatprep.subr.mxu0 0.0
    %109 = vmatpush1.xpose.msra.mxu0 %v70
    %110 = vmatprep.subr.mxu0 0.0
    %111 = vmatpush1.xpose.msra.mxu0 %v73
    %112 = vmatprep.subr.mxu0 0.0
    %113 = vmatpush1.xpose.msra.mxu0 %v76
    %114 = vmatprep.subr.mxu0 0.0
    %115 = vmatpush1.xpose.msra.mxu0 %v79
    %116 = vmatprep.subr.mxu0 0.0
    %117 = vmatpush1.xpose.msra.mxu0 %v82
    %118 = vmatprep.subr.mxu0 0.0
    %119 = vmatpush1.xpose.msra.mxu0 %v85
    %120 = vmatprep.subr.mxu0 0.0
    %121 = vmatpush1.xpose.msra.mxu0 %v88
    %122 = vmatprep.subr.mxu0 0.0
    %123 = vmatpush1.xpose.msra.mxu0 0.0
    %124 = vmatprep.subr.mxu0 0.0
    %125 = vmatpush1.xpose.msra.mxu0 0.0
    %126 = vmatprep.subr.mxu0 0.0
    %127 = vmatpush1.xpose.msra.mxu0 0.0
    %128 = vmatprep.subr.mxu0 0.0
    %129 = vmatpush1.xpose.msra.mxu0 0.0
    %130 = vmatprep.subr.mxu0 0.0
    %131 = vmatpush1.xpose.msra.mxu0 0.0
    %132 = vmatprep.subr.mxu0 0.0
    %133 = vmatpush1.xpose.msra.mxu0 0.0
    %134 = vmatprep.subr.mxu0 0.0
    %135 = vmatpush1.xpose.msra.mxu0 0.0
    %136 = vmatprep.subr.mxu0 0.0
    %137 = vmatpush1.xpose.msra.mxu0 0.0
    %138 = vmatprep.subr.mxu0 0.0
    %139 = vmatpush1.xpose.msra.mxu0 0.0
    %140 = vmatprep.subr.mxu0 0.0
    %141 = vmatpush1.xpose.msra.mxu0 0.0
    %142 = vmatprep.subr.mxu0 0.0
    %143 = vmatpush1.xpose.msra.mxu0 0.0
    %144 = vmatprep.subr.mxu0 0.0
    %145 = vmatpush1.xpose.msra.mxu0 0.0
    %146 = vmatprep.subr.mxu0 0.0
    %147 = vmatpush1.xpose.msra.mxu0 0.0
    %148 = vmatprep.subr.mxu0 0.0
    %149 = vmatpush1.xpose.msra.mxu0 0.0
    %150 = vmatprep.subr.mxu0 0.0
    %151 = vmatpush1.xpose.msra.mxu0 0.0
    %152 = vmatprep.subr.mxu0 0.0
    %153 = vmatpush1.xpose.msra.mxu0 0.0
    %154 = vmatprep.mubr.f32.mxu0 0.0
    %155 = vmatmul.mubr.f32.gmra.mrb[0].mxu0 %v40
    %v156 = vpop.f32.mrb[0].mxu0
    %v157 = vadd.f32 0.0, %v156
    %v158 = vpop.f32.mrb[0].mxu0
    %159 = vdwg.mxu0
    %v160 = vadd.f32 %v20, %v157
    %161 = vst [vmem:[#allocation2] sm:$0xff] %v160
    // Predicated region
    $region18: #{tpu_custom_call.1} parent=1 // pred_check
      %p162 = pneg %p15
    $region19: #{tpu_custom_call.1} parent=1 // pred_check_branch
      %164 = sbr.rel (%p162) target = $region21
    $region20: #{tpu_custom_call.1} parent=1 // pred_region
      %v165 = vld [vmem:[#allocation2] sm:$0xff]
      %v166 = vld [vmem:[%s2] sm:$0x1]
      %v168 = vlaneseq
      %v169 = vshrl.u32 %v168, 7
      %v170 = vsub.s32 0, %v169
      %v171 = vrot.slane %v166, %v170
      %v173 = vadd.f32 %v165, %v171
      %174 = vst [vmem:[#allocation3] sm:$0xff] %v173
    $region21: #{tpu_custom_call.1} parent=1 // pred_fallthru
      _
    // Predicated region
    $region22: #{tpu_custom_call.1} parent=1 // pred_check
      _
    $region23: #{tpu_custom_call.1} parent=1 // pred_check_branch
      %176 = sbr.rel (0) target = $region25
    $region24: #{tpu_custom_call.1} parent=1 // pred_region
      %s178 = ssub.s32 128, 128
      %179 = vsyncadd [#allocation4], %s178
      %s181 = sshll.u32 [#allocation3], 4
      %s182 = int_to_ptr.vmem [resolvable:$true] %s181
      %184 = dma.vmem_to_hbm [thread:$0]  %s182, 128, %s3, [#allocation4]
    $region25: #{tpu_custom_call.1} parent=1 // pred_fallthru
      _
    // Predicated region
    $region26: #{tpu_custom_call.1} parent=1 // pred_check
      _
    $region27: #{tpu_custom_call.1} parent=1 // pred_check_branch
      %186 = sbr.rel (0) target = $region29
    $region28: #{tpu_custom_call.1} parent=1 // pred_region
      %187 = dma.done [#allocation4], 128
    $region29: #{tpu_custom_call.1} parent=1 // pred_fallthru
      _
    %188 = vsyncpa [#allocation4], 1

</llo_original>
